<compile_context>
chip_gen: v7x
topology: tpu7x:2x2x1
jax: 0.10.0
libtpu: 0.0.40
codegen_flags: <defaults>
</compile_context>

<pallas_src>
import functools
import random

import jax
import jax.numpy as jnp
from jax.experimental import pallas as pl
from jax.experimental.pallas import tpu as pltpu


# ----------------------------------------------------------------------------- kernel
def disc_bce_kernel(xc_ref, xi_ref, w1_ref, b1_ref, w2_ref, b2_ref, out_ref,
                    *, inv_pairs):
    """Grid = (N_tiles, P_pairs); the pair (reduction) axis is innermost.

    xc_ref/xi_ref : [F, tile_n]   bf16  im2col'ed correct/incorrect pixels (pixels on lanes)
    w1_ref        : [hidden, F]   bf16  conv3x3-as-matmul weights (transposed)
    b1_ref        : [hidden, 1]   f32
    w2_ref        : [hidden, 1]   f32   1x1-conv weights
    b2_ref        : [1, 1]        f32   (SMEM scalar)
    out_ref       : [1, tile_n]   f32   per-pixel loss, accumulated in place over pairs
    """
    p = pl.program_id(1)

    @pl.when(p == 0)
    def _():
        out_ref[...] = jnp.zeros_like(out_ref)

    w1 = w1_ref[...]            # stationary MXU operand, shared by both branches
    b1 = b1_ref[...]
    w2 = w2_ref[...]
    b2 = b2_ref[0, 0]           # scalar from SMEM

    def logits(x_ref):
        # conv3x3-as-matmul (bf16 MXU, f32 accumulate) -> ReLU -> 1x1 conv as
        # f32 VPU multiply + sublane reduce.  Result is lane-dense: [1, tile_n].
        h = jnp.dot(w1, x_ref[...], preferred_element_type=jnp.float32) + b1
        h = jnp.maximum(h, 0.0)
        return jnp.sum(h * w2, axis=0, keepdims=True) + b2

    def softplus(x):
        # softplus(x) == BCEWithLogits(x, target=0); BCE(x, target=1) == softplus(-x)
        return jnp.maximum(x, 0.0) + jnp.log1p(jnp.exp(-jnp.abs(x)))

    z_correct = logits(xc_ref)      # target = 1
    z_incorrect = logits(xi_ref)    # target = 0
    out_ref[...] += softplus(z_incorrect) + softplus(-z_correct)

    @pl.when(p == pl.num_programs(1) - 1)
    def _():
        # loss /= (fmo_train_steps - 1): multiply by precomputed reciprocal.
        out_ref[...] = out_ref[...] * inv_pairs


def _pick_tile_n(n, max_tile=2048):
    """Largest multiple-of-128 divisor of n (capped), preferring >=2 tiles so the
    'parallel' axis can be sharded across v7x's two TensorCores."""
    assert n % 128 == 0, f"pixel count N={n} must be a multiple of 128"
    cands = [t for t in range(128, min(n, max_tile) + 1, 128) if n % t == 0]
    multi = [t for t in cands if n // t >= 2]
    return max(multi) if multi else max(cands)


def temporal_nn_loss_pallas(xc_t, xi_t, w1_t, b1_col, w2_col, b2, *, tile_n=None):
    """xc_t/xi_t: [P, F, N] bf16 (pixels on lanes). Returns the [1, N] f32 loss map."""
    P, F, N = xc_t.shape
    hidden = w1_t.shape[0]
    if tile_n is None:
        tile_n = _pick_tile_n(N)
    assert N % tile_n == 0 and tile_n % 128 == 0

    kernel = functools.partial(disc_bce_kernel, inv_pairs=1.0 / P)

    return pl.pallas_call(
        kernel,
        out_shape=jax.ShapeDtypeStruct((1, N), jnp.float32),
        grid_spec=pltpu.PrefetchScalarGridSpec(
            num_scalar_prefetch=0,
            grid=(N // tile_n, P),                               # pairs (reduction) innermost
            in_specs=[
                pl.BlockSpec((None, F, tile_n), lambda n, p: (p, 0, n)),
                pl.BlockSpec((None, F, tile_n), lambda n, p: (p, 0, n)),
                pl.BlockSpec((hidden, F), lambda n, p: (0, 0)),
                pl.BlockSpec((hidden, 1), lambda n, p: (0, 0)),
                pl.BlockSpec((hidden, 1), lambda n, p: (0, 0)),
                pl.BlockSpec(memory_space=pltpu.MemorySpace.SMEM),   # b2 scalar in SMEM
            ],
            out_specs=pl.BlockSpec((1, tile_n), lambda n, p: (0, n)),
        ),
        compiler_params=pltpu.CompilerParams(
            dimension_semantics=("parallel", "arbitrary")),
    )(xc_t, xi_t, w1_t, b1_col, w2_col, b2)


# ----------------------------------------------------------------------------- glue
def im2col_3x3(x_nhwc):
    """[B, H, W, C] -> [B*H*W, 9*C]  (3x3 neighbourhood, zero pad=1)."""
    B, H, W, C = x_nhwc.shape
    xp = jnp.pad(x_nhwc, ((0, 0), (1, 1), (1, 1), (0, 0)))
    patches = [xp[:, dy:dy + H, dx:dx + W, :] for dy in range(3) for dx in range(3)]
    return jnp.concatenate(patches, axis=-1).reshape(B * H * W, 9 * C)


def build_pairs(renders, fmo_train_steps, seed=0):
    """Mirrors the PyTorch forward's frame-pair construction (random offsets, host-side)."""
    renders = renders[:, :fmo_train_steps, :4]          # [B, T, 4, H, W]
    rng = random.Random(seed)                           # deterministic stand-in for `random`
    xc_list, xi_list = [], []
    for frame_num in range(fmo_train_steps - 1):
        offset = rng.choice(range(2, fmo_train_steps))
        choice = (frame_num + offset) % fmo_train_steps
        correct = jnp.concatenate(
            [renders[:, frame_num], renders[:, frame_num + 1]], axis=1)   # [B, 8, H, W]
        incorrect = jnp.concatenate(
            [renders[:, frame_num], renders[:, choice]], axis=1)          # [B, 8, H, W]
        xc_list.append(im2col_3x3(jnp.transpose(correct, (0, 2, 3, 1))))
        xi_list.append(im2col_3x3(jnp.transpose(incorrect, (0, 2, 3, 1))))
    return jnp.stack(xc_list), jnp.stack(xi_list)        # [P, B*H*W, 72]


def reference_loss(xc, xi, w1, b1, w2, b2):
    """Row-major pure-JAX reference using the BCEWithLogits formula (same bf16 inputs)."""
    def logits(x):
        h = jnp.maximum(jnp.dot(x, w1, preferred_element_type=jnp.float32) + b1, 0.0)
        return jnp.dot(h, w2, precision=jax.lax.Precision.HIGHEST,
                       preferred_element_type=jnp.float32) + b2

    def bce(z, t):
        return jnp.maximum(z, 0.0) - z * t + jnp.log1p(jnp.exp(-jnp.abs(z)))

    total = jnp.zeros((xc.shape[1], 1), jnp.float32)
    for p in range(xc.shape[0]):
        total = total + bce(logits(xi[p]), 0.0) + bce(logits(xc[p]), 1.0)
    return total / xc.shape[0]


# ----------------------------------------------------------------------------- main
if __name__ == "__main__":
    B, T, C, H, W = 2, 4, 4, 16, 16      # renders: [B, T, C, H, W]
    fmo_train_steps = 4                  # config.fmo_train_steps
    hidden = 32
    F = 8 * 9                            # 8 concatenated channels x 3x3 patch

    key = jax.random.PRNGKey(0)
    k_r, k_w1, k_b1, k_w2, k_b2 = jax.random.split(key, 5)
    renders = jax.random.uniform(k_r, (B, T, C, H, W), jnp.float32)

    # deterministic synthetic discriminator parameters
    w1 = 0.1 * jax.random.normal(k_w1, (F, hidden), jnp.float32)
    b1 = 0.05 * jax.random.normal(k_b1, (1, hidden), jnp.float32)
    w2 = 0.1 * jax.random.normal(k_w2, (hidden, 1), jnp.float32)
    b2 = 0.05 * jax.random.normal(k_b2, (1, 1), jnp.float32)

    xc_rm, xi_rm = build_pairs(renders, fmo_train_steps, seed=0)   # [P, N, 72] f32

    # bf16 for the two big input streams + w1 (math after the MXU stays f32).
    xc_bf = xc_rm.astype(jnp.bfloat16)
    xi_bf = xi_rm.astype(jnp.bfloat16)
    xc_t = jnp.transpose(xc_bf, (0, 2, 1))                         # [P, 72, N] pixels-on-lanes
    xi_t = jnp.transpose(xi_bf, (0, 2, 1))
    w1_t = jnp.transpose(w1.astype(jnp.bfloat16), (1, 0))          # [hidden, 72]
    b1_col = b1.reshape(hidden, 1)                                 # [hidden, 1] f32
    w2_col = w2                                                    # [hidden, 1] f32

    loss_lane = temporal_nn_loss_pallas(xc_t, xi_t, w1_t, b1_col, w2_col, b2)   # [1, N]
    loss_lane = jax.block_until_ready(loss_lane)

    # reshape back to the PyTorch output convention: [B, 1, H, W] (reduction='none')
    loss_nchw = loss_lane[0].reshape(B, H, W)[:, None, :, :]

    ref = reference_loss(xc_bf, xi_bf, w1.astype(jnp.bfloat16), b1, w2, b2)     # [N, 1]
    assert jnp.allclose(loss_lane[0], ref[:, 0], atol=2e-3, rtol=2e-3), "mismatch vs reference"
    assert loss_nchw.shape == (B, 1, H, W)

    print("KERNEL_OK")
</pallas_src>

<mosaic_0001>
module attributes {stable_mosaic.version = 11 : i64} {
  func.func @disc_bce_kernel(%arg0: i32, %arg1: i32, %arg2: memref<1x72x256xbf16, #tpu.memory_space<vmem>>, %arg3: memref<1x72x256xbf16, #tpu.memory_space<vmem>>, %arg4: memref<32x72xbf16, #tpu.memory_space<vmem>>, %arg5: memref<32x1xf32, #tpu.memory_space<vmem>>, %arg6: memref<32x1xf32, #tpu.memory_space<vmem>>, %arg7: memref<1x1xf32, #tpu.memory_space<smem>>, %arg8: memref<1x256xf32, #tpu.memory_space<vmem>>) attributes {dimension_semantics = [#tpu.dimension_semantics<parallel>, #tpu.dimension_semantics<arbitrary>], iteration_bounds = array<i64: 2, 3>, scalar_prefetch = 0 : i64, scratch_operands = 0 : i64, tpu.core_type = #tpu.core_type<tc>, window_params = [{transform_indices = @transform_0, window_bounds = array<i64: 1, 72, 256>}, {transform_indices = @transform_1, window_bounds = array<i64: 1, 72, 256>}, {pipeline_mode = #tpu.pipeline_mode<synchronous>, transform_indices = @transform_2, window_bounds = array<i64: 32, 72>}, {pipeline_mode = #tpu.pipeline_mode<synchronous>, transform_indices = @transform_3, window_bounds = array<i64: 32, 1>}, {pipeline_mode = #tpu.pipeline_mode<synchronous>, transform_indices = @transform_4, window_bounds = array<i64: 32, 1>}, {transform_indices = @transform_5, window_bounds = array<i64: 1, 1>}, {transform_indices = @transform_6, window_bounds = array<i64: 1, 256>}]} {
    %c0_i32 = arith.constant 0 : i32
    %0 = arith.cmpi eq, %arg1, %c0_i32 : i32
    %1 = arith.extui %0 : i1 to i32
    %c0_i32_0 = arith.constant 0 : i32
    %2 = arith.cmpi ne, %1, %c0_i32_0 : i32
    scf.if %2 {
      %cst_29 = arith.constant 0.000000e+00 : f32
      %58 = vector.broadcast %cst_29 : f32 to vector<1x256xf32>
      %c0_30 = arith.constant 0 : index
      %c0_31 = arith.constant 0 : index
      %59 = vector.load %arg8[%c0_30, %c0_31] : memref<1x256xf32, #tpu.memory_space<vmem>>, vector<1x256xf32>
      tpu.vector_store %arg8[%c0_30, %c0_31], %58 {strides = array<i32>} : memref<1x256xf32, #tpu.memory_space<vmem>>, vector<1x256xf32>,
    } else {
    }
    %c0 = arith.constant 0 : index
    %c0_1 = arith.constant 0 : index
    %3 = vector.load %arg4[%c0, %c0_1] : memref<32x72xbf16, #tpu.memory_space<vmem>>, vector<32x72xbf16>
    %c0_2 = arith.constant 0 : index
    %c0_3 = arith.constant 0 : index
    %4 = vector.load %arg5[%c0_2, %c0_3] : memref<32x1xf32, #tpu.memory_space<vmem>>, vector<32x1xf32>
    %c0_4 = arith.constant 0 : index
    %c0_5 = arith.constant 0 : index
    %5 = vector.load %arg6[%c0_4, %c0_5] : memref<32x1xf32, #tpu.memory_space<vmem>>, vector<32x1xf32>
    %c0_6 = arith.constant 0 : index
    %c0_7 = arith.constant 0 : index
    %6 = memref.load %arg7[%c0_6, %c0_7] : memref<1x1xf32, #tpu.memory_space<smem>>
    %c0_8 = arith.constant 0 : index
    %c0_9 = arith.constant 0 : index
    %c0_10 = arith.constant 0 : index
    %7 = vector.load %arg2[%c0_8, %c0_9, %c0_10] : memref<1x72x256xbf16, #tpu.memory_space<vmem>>, vector<1x72x256xbf16>
    %8 = vector.shape_cast %7 : vector<1x72x256xbf16> to vector<72x256xbf16>
    %cst = arith.constant dense<0.000000e+00> : vector<32x256xf32>
    %9 = tpu.matmul %3, %8, %cst {dimension_numbers = #tpu.dot_dimension_numbers<[1], [0], [0], [1], [0, 0, 1, 1], [], []>} : vector<32x72xbf16>, vector<72x256xbf16>, vector<32x256xf32> -> vector<32x256xf32>
    %10 = vector.broadcast %4 : vector<32x1xf32> to vector<32x256xf32>
    %11 = arith.addf %9, %10 : vector<32x256xf32>
    %cst_11 = arith.constant 0.000000e+00 : f32
    %12 = vector.broadcast %cst_11 : f32 to vector<32x256xf32>
    %13 = arith.maximumf %11, %12 : vector<32x256xf32>
    %14 = vector.broadcast %5 : vector<32x1xf32> to vector<32x256xf32>
    %15 = arith.mulf %13, %14 : vector<32x256xf32>
    %cst_12 = arith.constant dense<0.000000e+00> : vector<256xf32>
    %16 = vector.multi_reduction <add>, %15, %cst_12 [0] : vector<32x256xf32> to vector<256xf32>
    %17 = vector.shape_cast %16 : vector<256xf32> to vector<1x256xf32>
    %18 = vector.broadcast %6 : f32 to vector<1x256xf32>
    %19 = arith.addf %17, %18 : vector<1x256xf32>
    %c0_13 = arith.constant 0 : index
    %c0_14 = arith.constant 0 : index
    %c0_15 = arith.constant 0 : index
    %20 = vector.load %arg3[%c0_13, %c0_14, %c0_15] : memref<1x72x256xbf16, #tpu.memory_space<vmem>>, vector<1x72x256xbf16>
    %21 = vector.shape_cast %20 : vector<1x72x256xbf16> to vector<72x256xbf16>
    %cst_16 = arith.constant dense<0.000000e+00> : vector<32x256xf32>
    %22 = tpu.matmul %3, %21, %cst_16 {dimension_numbers = #tpu.dot_dimension_numbers<[1], [0], [0], [1], [0, 0, 1, 1], [], []>} : vector<32x72xbf16>, vector<72x256xbf16>, vector<32x256xf32> -> vector<32x256xf32>
    %23 = vector.broadcast %4 : vector<32x1xf32> to vector<32x256xf32>
    %24 = arith.addf %22, %23 : vector<32x256xf32>
    %cst_17 = arith.constant 0.000000e+00 : f32
    %25 = vector.broadcast %cst_17 : f32 to vector<32x256xf32>
    %26 = arith.maximumf %24, %25 : vector<32x256xf32>
    %27 = vector.broadcast %5 : vector<32x1xf32> to vector<32x256xf32>
    %28 = arith.mulf %26, %27 : vector<32x256xf32>
    %cst_18 = arith.constant dense<0.000000e+00> : vector<256xf32>
    %29 = vector.multi_reduction <add>, %28, %cst_18 [0] : vector<32x256xf32> to vector<256xf32>
    %30 = vector.shape_cast %29 : vector<256xf32> to vector<1x256xf32>
    %31 = vector.broadcast %6 : f32 to vector<1x256xf32>
    %32 = arith.addf %30, %31 : vector<1x256xf32>
    %c0_19 = arith.constant 0 : index
    %c0_20 = arith.constant 0 : index
    %33 = vector.load %arg8[%c0_19, %c0_20] : memref<1x256xf32, #tpu.memory_space<vmem>>, vector<1x256xf32>
    %cst_21 = arith.constant 0.000000e+00 : f32
    %34 = vector.broadcast %cst_21 : f32 to vector<1x256xf32>
    %35 = arith.maximumf %32, %34 : vector<1x256xf32>
    %36 = math.absf %32 : vector<1x256xf32>
    %cst_22 = arith.constant 0.000000e+00 : f32
    %37 = vector.broadcast %cst_22 : f32 to vector<1x256xf32>
    %38 = arith.subf %37, %36 : vector<1x256xf32>
    %39 = math.exp %38 : vector<1x256xf32>
    %40 = math.log1p %39 : vector<1x256xf32>
    %41 = arith.addf %35, %40 : vector<1x256xf32>
    %cst_23 = arith.constant 0.000000e+00 : f32
    %42 = vector.broadcast %cst_23 : f32 to vector<1x256xf32>
    %43 = arith.subf %42, %19 : vector<1x256xf32>
    %cst_24 = arith.constant 0.000000e+00 : f32
    %44 = vector.broadcast %cst_24 : f32 to vector<1x256xf32>
    %45 = arith.maximumf %43, %44 : vector<1x256xf32>
    %46 = math.absf %43 : vector<1x256xf32>
    %cst_25 = arith.constant 0.000000e+00 : f32
    %47 = vector.broadcast %cst_25 : f32 to vector<1x256xf32>
    %48 = arith.subf %47, %46 : vector<1x256xf32>
    %49 = math.exp %48 : vector<1x256xf32>
    %50 = math.log1p %49 : vector<1x256xf32>
    %51 = arith.addf %45, %50 : vector<1x256xf32>
    %52 = arith.addf %41, %51 : vector<1x256xf32>
    %53 = arith.addf %33, %52 : vector<1x256xf32>
    %c0_26 = arith.constant 0 : index
    %c0_27 = arith.constant 0 : index
    %54 = vector.load %arg8[%c0_26, %c0_27] : memref<1x256xf32, #tpu.memory_space<vmem>>, vector<1x256xf32>
    tpu.vector_store %arg8[%c0_26, %c0_27], %53 {strides = array<i32>} : memref<1x256xf32, #tpu.memory_space<vmem>>, vector<1x256xf32>,
    %c2_i32 = arith.constant 2 : i32
    %55 = arith.cmpi eq, %arg1, %c2_i32 : i32
    %56 = arith.extui %55 : i1 to i32
    %c0_i32_28 = arith.constant 0 : i32
    %57 = arith.cmpi ne, %56, %c0_i32_28 : i32
    scf.if %57 {
      %c0_29 = arith.constant 0 : index
      %c0_30 = arith.constant 0 : index
      %58 = vector.load %arg8[%c0_29, %c0_30] : memref<1x256xf32, #tpu.memory_space<vmem>>, vector<1x256xf32>
      %cst_31 = arith.constant 0.333333343 : f32
      %59 = vector.broadcast %cst_31 : f32 to vector<1x256xf32>
      %60 = arith.mulf %58, %59 : vector<1x256xf32>
      %c0_32 = arith.constant 0 : index
      %c0_33 = arith.constant 0 : index
      %61 = vector.load %arg8[%c0_32, %c0_33] : memref<1x256xf32, #tpu.memory_space<vmem>>, vector<1x256xf32>
      tpu.vector_store %arg8[%c0_32, %c0_33], %60 {strides = array<i32>} : memref<1x256xf32, #tpu.memory_space<vmem>>, vector<1x256xf32>,
    } else {
    }
    return
  }
  func.func @transform_0(%arg0: i32, %arg1: i32) -> (i32, i32, i32) {
    %c0_i32 = arith.constant 0 : i32
    %c0_i32_0 = arith.constant 0 : i32
    return %arg1, %c0_i32, %arg0 : i32, i32, i32
  }
  func.func @transform_1(%arg0: i32, %arg1: i32) -> (i32, i32, i32) {
    %c0_i32 = arith.constant 0 : i32
    %c0_i32_0 = arith.constant 0 : i32
    return %arg1, %c0_i32, %arg0 : i32, i32, i32
  }
  func.func @transform_2(%arg0: i32, %arg1: i32) -> (i32, i32) {
    %c0_i32 = arith.constant 0 : i32
    %c0_i32_0 = arith.constant 0 : i32
    %c0_i32_1 = arith.constant 0 : i32
    return %c0_i32, %c0_i32_0 : i32, i32
  }
  func.func @transform_3(%arg0: i32, %arg1: i32) -> (i32, i32) {
    %c0_i32 = arith.constant 0 : i32
    %c0_i32_0 = arith.constant 0 : i32
    %c0_i32_1 = arith.constant 0 : i32
    return %c0_i32, %c0_i32_0 : i32, i32
  }
  func.func @transform_4(%arg0: i32, %arg1: i32) -> (i32, i32) {
    %c0_i32 = arith.constant 0 : i32
    %c0_i32_0 = arith.constant 0 : i32
    %c0_i32_1 = arith.constant 0 : i32
    return %c0_i32, %c0_i32_0 : i32, i32
  }
  func.func @transform_5(%arg0: i32, %arg1: i32) -> (i32, i32) {
    %c0_i32 = arith.constant 0 : i32
    %c0_i32_0 = arith.constant 0 : i32
    %c0_i32_1 = arith.constant 0 : i32
    return %c0_i32, %c0_i32_0 : i32, i32
  }
  func.func @transform_6(%arg0: i32, %arg1: i32) -> (i32, i32) {
    %c0_i32 = arith.constant 0 : i32
    %c0_i32_0 = arith.constant 0 : i32
    return %c0_i32, %arg0 : i32, i32
  }
}

</mosaic_0001>

<llo_original>
// kernel: tpu_custom_call.1
$region0: #{tpu_custom_call.1}
  #allocation0 [shape = 'u32[]', space=smem, size = 0x4, offset = 0x4, fixed_abs, tag = 'smem constant byte address 0x4 - core index']
  #allocation1 [shape = 'u32[144,128]{1,0:T(1,128)}', space=vmem, size = 0x12000, scoped, tag = 'internal scratch']
  #allocation2 [shape = 'f32[1,1]{1,0:T(1,128)S(6)}', space=smem, size = 0x200, scoped, tag = 'scoped memory for tpu_custom_call.1']
  %s0 = inlined_call_operand.hbm [shape: bf16[3,72,512], index: 0, kind: input, shape index: {}]
  %s1 = inlined_call_operand.hbm [shape: bf16[3,72,512], index: 1, kind: input, shape index: {}]
  %s2 = inlined_call_operand.vmem [shape: bf16[32,72], index: 2, kind: input, shape index: {}]
  %s3 = inlined_call_operand.vmem [shape: f32[32,1], index: 3, kind: input, shape index: {}]
  %s4 = inlined_call_operand.vmem [shape: f32[32,1], index: 4, kind: input, shape index: {}]
  %s5 = inlined_call_operand.<no memory space> [shape: f32[1,1], index: 5, kind: input, shape index: {}]
  %s6 = inlined_call_operand.hbm [shape: f32[1,512], index: 6, kind: output, shape index: {}]
  %s7 = sld [smem:[#allocation0]]
  $region73: #{tpu_custom_call.1} parent=0
    _
  %s9 = ssub.s32 1, %s7
  %s10 = scalar_select 0, %s9, %s7
  %11 = sst [smem:[#allocation2]] %s5
  $region1: #{tpu_custom_call.1} parent=0
    #allocation3 [shape = 'u8[73728]{0}', space=vmem, size = 0x12000, scoped, tag = 'input window, operand 0']
    #allocation4 [shape = 's32[2]{0}', space=sflag, size = 0x8, scoped, tag = 'scoped memory for tpu_custom_call.1']
    #allocation5 [shape = 's32[2]{0}', space=sflag, size = 0x8, scoped, tag = 'scoped memory for tpu_custom_call.1']
    #allocation6 [shape = 'u8[73728]{0}', space=vmem, size = 0x12000, scoped, tag = 'input window, operand 1']
    #allocation7 [shape = 's32[2]{0}', space=sflag, size = 0x8, scoped, tag = 'scoped memory for tpu_custom_call.1']
    #allocation8 [shape = 'u8[2048]{0}', space=vmem, size = 0x800, scoped, tag = 'output window, operand 0']
    %12 = vsyncpa [#allocation4], 0
    %s13 = scalar_lea.sflag [#allocation4], 1
    %14 = vsyncpa %s13, 0
    %15 = vsyncpa [#allocation7], 0
    %s16 = scalar_lea.sflag [#allocation7], 1
    %17 = vsyncpa %s16, 0
    %18 = vsyncpa [#allocation5], 0
    %s19 = scalar_lea.sflag [#allocation5], 1
    %20 = vsyncpa %s19, 0
    loop: start=0, step=1, limit=8
    $region2: #{tpu_custom_call.1} parent=1 // loop_pre_header
      _
    $region3: #{tpu_custom_call.1} parent=1 // loop_header
      %s22 = sphi 0, %s26
      %p23 = scmp.ge.s32.totalorder %s22, 8
      %s29 = sphi 0, %s41
      %s30 = sphi 0, %s37
      %s31 = sphi 0, %s29
      %s32 = sphi 0, %s30
      %s33 = sphi 0, %s31
      %s34 = sphi 0, %s32
      %s46 = sphi 0, %s48
      %s49 = sphi 0, %s46
      %s50 = sphi 0, %s49
      %s66 = sphi 0, %s50
      %s74 = sphi 0, %s76
      %s77 = sphi 0, %s74
      %s78 = sphi 0, %s77
      %s94 = sphi 0, %s78
      %s98 = sphi 0, %s98
      %s100 = sphi 0, %s98
      %s101 = sphi 0, %s100
      %s115 = sphi 0, %s101
      %s119 = sphi 0, %s119
      %s121 = sphi 0, %s119
      %s122 = sphi 0, %s121
      %s136 = sphi 0, %s122
      %s140 = sphi 0, %s140
      %s142 = sphi 0, %s140
      %s143 = sphi 0, %s142
      %s157 = sphi 0, %s143
      %s161 = sphi 0, %s161
      %s163 = sphi 0, %s161
      %s164 = sphi 0, %s163
      %s178 = sphi 0, %s164
      %s184 = sphi 0, %s186
      %s187 = sphi 0, %s184
      %s188 = sphi 0, %s187
      %s204 = sphi 0, %s188
    $region4: #{tpu_custom_call.1} parent=1 // loop_header_branch
      %25 = sbr.rel (%p23) target = $region8
    $region5: #{tpu_custom_call.1} parent=1 // loop_body
      %s27 = ssub.s32 %s22, 1
      %s28 = ssub.s32 %s22, 2
      %s35 = sadd.s32 1, %s30
      %p36 = scmp.ge.s32.totalorder %s35, 3
      %s37 = scalar_select %p36, 0, %s35
      %s38 = sadd.s32 1, %s29
      %s39 = scalar_select %p36, %s38, %s29
      %p40 = scmp.ge.s32.totalorder %s39, 2
      %s41 = scalar_select %p40, 0, %s39
      %s42 = ssub.s32 %s30, %s37
      %s43 = ssub.s32 %s29, %s41
      %s44 = sor.u32 %s42, %s43
      %p45 = scmp.eq.s32.totalorder %s44, 0
      %s47 = sadd.s32 %s46, 1
      %s48 = scalar_select %p45, %s46, %s47
      %p51 = pneg %p45
      %p52 = scmp.eq.s32.totalorder %s22, 5
      %p53 = por %p51, %p52
      %p54 = scmp.ne.s32.totalorder %s46, %s49
      %p55 = scmp.eq.s32.totalorder %s22, 0
      %p56 = por %p54, %p55
      %p57 = scmp.ne.s32.totalorder %s46, %s49
      %p58 = scmp.eq.s32.totalorder %s27, 5
      %p59 = por %p57, %p58
      %p60 = scmp.ne.s32.totalorder %s49, %s50
      %p61 = scmp.eq.s32.totalorder %s27, 0
      %p62 = por %p60, %p61
      %p63 = scmp.ne.s32.totalorder %s49, %s50
      %p64 = scmp.eq.s32.totalorder %s28, 5
      %p65 = por %p63, %p64
      %p67 = scmp.ne.s32.totalorder %s50, %s66
      %p68 = scmp.eq.s32.totalorder %s28, 0
      %p69 = por %p67, %p68
      %s70 = ssub.s32 %s30, %s37
      %s71 = ssub.s32 %s29, %s41
      %s72 = sor.u32 %s70, %s71
      %p73 = scmp.eq.s32.totalorder %s72, 0
      %s75 = sadd.s32 %s74, 1
      %s76 = scalar_select %p73, %s74, %s75
      %p79 = pneg %p73
      %p80 = scmp.eq.s32.totalorder %s22, 5
      %p81 = por %p79, %p80
      %p82 = scmp.ne.s32.totalorder %s74, %s77
      %p83 = scmp.eq.s32.totalorder %s22, 0
      %p84 = por %p82, %p83
      %p85 = scmp.ne.s32.totalorder %s74, %s77
      %p86 = scmp.eq.s32.totalorder %s27, 5
      %p87 = por %p85, %p86
      %p88 = scmp.ne.s32.totalorder %s77, %s78
      %p89 = scmp.eq.s32.totalorder %s27, 0
      %p90 = por %p88, %p89
      %p91 = scmp.ne.s32.totalorder %s77, %s78
      %p92 = scmp.eq.s32.totalorder %s28, 5
      %p93 = por %p91, %p92
      %p95 = scmp.ne.s32.totalorder %s78, %s94
      %p96 = scmp.eq.s32.totalorder %s28, 0
      %p97 = por %p95, %p96
      %s99 = sadd.s32 %s98, 1
      %p102 = scmp.eq.s32.totalorder %s22, 5
      %p103 = scmp.ne.s32.totalorder %s98, %s100
      %p104 = scmp.eq.s32.totalorder %s22, 0
      %p105 = por %p103, %p104
      %p106 = scmp.ne.s32.totalorder %s98, %s100
      %p107 = scmp.eq.s32.totalorder %s27, 5
      %p108 = por %p106, %p107
      %p109 = scmp.ne.s32.totalorder %s100, %s101
      %p110 = scmp.eq.s32.totalorder %s27, 0
      %p111 = por %p109, %p110
      %p112 = scmp.ne.s32.totalorder %s100, %s101
      %p113 = scmp.eq.s32.totalorder %s28, 5
      %p114 = por %p112, %p113
      %p116 = scmp.ne.s32.totalorder %s101, %s115
      %p117 = scmp.eq.s32.totalorder %s28, 0
      %p118 = por %p116, %p117
      %s120 = sadd.s32 %s119, 1
      %p123 = scmp.eq.s32.totalorder %s22, 5
      %p124 = scmp.ne.s32.totalorder %s119, %s121
      %p125 = scmp.eq.s32.totalorder %s22, 0
      %p126 = por %p124, %p125
      %p127 = scmp.ne.s32.totalorder %s119, %s121
      %p128 = scmp.eq.s32.totalorder %s27, 5
      %p129 = por %p127, %p128
      %p130 = scmp.ne.s32.totalorder %s121, %s122
      %p131 = scmp.eq.s32.totalorder %s27, 0
      %p132 = por %p130, %p131
      %p133 = scmp.ne.s32.totalorder %s121, %s122
      %p134 = scmp.eq.s32.totalorder %s28, 5
      %p135 = por %p133, %p134
      %p137 = scmp.ne.s32.totalorder %s122, %s136
      %p138 = scmp.eq.s32.totalorder %s28, 0
      %p139 = por %p137, %p138
      %s141 = sadd.s32 %s140, 1
      %p144 = scmp.eq.s32.totalorder %s22, 5
      %p145 = scmp.ne.s32.totalorder %s140, %s142
      %p146 = scmp.eq.s32.totalorder %s22, 0
      %p147 = por %p145, %p146
      %p148 = scmp.ne.s32.totalorder %s140, %s142
      %p149 = scmp.eq.s32.totalorder %s27, 5
      %p150 = por %p148, %p149
      %p151 = scmp.ne.s32.totalorder %s142, %s143
      %p152 = scmp.eq.s32.totalorder %s27, 0
      %p153 = por %p151, %p152
      %p154 = scmp.ne.s32.totalorder %s142, %s143
      %p155 = scmp.eq.s32.totalorder %s28, 5
      %p156 = por %p154, %p155
      %p158 = scmp.ne.s32.totalorder %s143, %s157
      %p159 = scmp.eq.s32.totalorder %s28, 0
      %p160 = por %p158, %p159
      %s162 = sadd.s32 %s161, 1
      %p165 = scmp.eq.s32.totalorder %s22, 5
      %p166 = scmp.ne.s32.totalorder %s161, %s163
      %p167 = scmp.eq.s32.totalorder %s22, 0
      %p168 = por %p166, %p167
      %p169 = scmp.ne.s32.totalorder %s161, %s163
      %p170 = scmp.eq.s32.totalorder %s27, 5
      %p171 = por %p169, %p170
      %p172 = scmp.ne.s32.totalorder %s163, %s164
      %p173 = scmp.eq.s32.totalorder %s27, 0
      %p174 = por %p172, %p173
      %p175 = scmp.ne.s32.totalorder %s163, %s164
      %p176 = scmp.eq.s32.totalorder %s28, 5
      %p177 = por %p175, %p176
      %p179 = scmp.ne.s32.totalorder %s164, %s178
      %p180 = scmp.eq.s32.totalorder %s28, 0
      %p181 = por %p179, %p180
      %s182 = ssub.s32 %s29, %s41
      %p183 = scmp.eq.s32.totalorder %s182, 0
      %s185 = sadd.s32 %s184, 1
      %s186 = scalar_select %p183, %s184, %s185
      %p189 = pneg %p183
      %p190 = scmp.eq.s32.totalorder %s22, 5
      %p191 = por %p189, %p190
      %p192 = scmp.ne.s32.totalorder %s184, %s187
      %p193 = scmp.eq.s32.totalorder %s22, 0
      %p194 = por %p192, %p193
      %p195 = scmp.ne.s32.totalorder %s184, %s187
      %p196 = scmp.eq.s32.totalorder %s27, 5
      %p197 = por %p195, %p196
      %p198 = scmp.ne.s32.totalorder %s187, %s188
      %p199 = scmp.eq.s32.totalorder %s27, 0
      %p200 = por %p198, %p199
      %p201 = scmp.ne.s32.totalorder %s187, %s188
      %p202 = scmp.eq.s32.totalorder %s28, 5
      %p203 = por %p201, %p202
      %p205 = scmp.ne.s32.totalorder %s188, %s204
      %p206 = scmp.eq.s32.totalorder %s28, 0
      %p207 = por %p205, %p206
      %p208 = scmp.le.s32.totalorder 1, %s22
      %p209 = scmp.lt.s32.totalorder %s22, 7
      %p210 = pnand %p208, %p209
      %p211 = pneg %p210
      // Predicated region
      $region9: #{tpu_custom_call.1} parent=5 // pred_check
        _
      $region10: #{tpu_custom_call.1} parent=5 // pred_check_branch
        %213 = sbr.rel (%p210) target = $region12
      $region11: #{tpu_custom_call.1} parent=5 // pred_region
        %s214 = ssub.s32 %s22, 1
        // Predicated region
        $region13: #{tpu_custom_call.1} parent=11 // pred_check
          %p215 = pneg %p111
        $region14: #{tpu_custom_call.1} parent=11 // pred_check_branch
          %217 = sbr.rel (%p215) target = $region16
        $region15: #{tpu_custom_call.1} parent=11 // pred_region
          _
        $region16: #{tpu_custom_call.1} parent=11 // pred_fallthru
          _
        // Predicated region
        $region17: #{tpu_custom_call.1} parent=11 // pred_check
          %p218 = pneg %p132
        $region18: #{tpu_custom_call.1} parent=11 // pred_check_branch
          %220 = sbr.rel (%p218) target = $region20
        $region19: #{tpu_custom_call.1} parent=11 // pred_region
          _
        $region20: #{tpu_custom_call.1} parent=11 // pred_fallthru
          _
        // Predicated region
        $region21: #{tpu_custom_call.1} parent=11 // pred_check
          %p221 = pneg %p153
        $region22: #{tpu_custom_call.1} parent=11 // pred_check_branch
          %223 = sbr.rel (%p221) target = $region24
        $region23: #{tpu_custom_call.1} parent=11 // pred_region
          _
        $region24: #{tpu_custom_call.1} parent=11 // pred_fallthru
          _
        // Predicated region
        $region25: #{tpu_custom_call.1} parent=11 // pred_check
          %p224 = pneg %p174
        $region26: #{tpu_custom_call.1} parent=11 // pred_check_branch
          %226 = sbr.rel (%p224) target = $region28
        $region27: #{tpu_custom_call.1} parent=11 // pred_region
          _
        $region28: #{tpu_custom_call.1} parent=11 // pred_fallthru
          _
      $region12: #{tpu_custom_call.1} parent=5 // pred_fallthru
        _
      %p227 = scmp.lt.s32.totalorder %s22, 6
      // Predicated region
      $region29: #{tpu_custom_call.1} parent=5 // pred_check
        %p228 = pneg %p227
      $region30: #{tpu_custom_call.1} parent=5 // pred_check_branch
        %230 = sbr.rel (%p228) target = $region32
      $region31: #{tpu_custom_call.1} parent=5 // pred_region
        // Predicated region
        $region33: #{tpu_custom_call.1} parent=31 // pred_check
          %p231 = pneg %p56
        $region34: #{tpu_custom_call.1} parent=31 // pred_check_branch
          %233 = sbr.rel (%p231) target = $region36
        $region35: #{tpu_custom_call.1} parent=31 // pred_region
          %s234 = sand.u32 %s46, 1
          %s235 = scalar_lea.sflag [#allocation4], %s234
          %s236 = sand.u32 %s46, 1
          %s237 = smul.addr %s236, 72
          %s238 = scalar_lea.vmem [#allocation3], %s237
          %s239 = smul.u32 2, %s29
          %s241 = ssub.s32 1152, 1152
          %242 = vsyncadd %s235, %s241
          %s243 = smul.addr %s30, 36
          %s244 = sadd.s32 %s239, %s243
          %s245 = smul.addr %s244, 64
          %s246 = scalar_lea.hbm %s0, %s245
          %s247 = sshll.u32 %s238, 4
          %s248 = int_to_ptr.vmem [resolvable:$true] %s247
          %253 = dma.hbm_to_vmem [thread:$0]  %s246, 1152, %s248, %s235, 256, 128, 8
        $region36: #{tpu_custom_call.1} parent=31 // pred_fallthru
          _
        // Predicated region
        $region37: #{tpu_custom_call.1} parent=31 // pred_check
          %p254 = pneg %p84
        $region38: #{tpu_custom_call.1} parent=31 // pred_check_branch
          %256 = sbr.rel (%p254) target = $region40
        $region39: #{tpu_custom_call.1} parent=31 // pred_region
          %s257 = sand.u32 %s74, 1
          %s258 = scalar_lea.sflag [#allocation7], %s257
          %s259 = sand.u32 %s74, 1
          %s260 = smul.addr %s259, 72
          %s261 = scalar_lea.vmem [#allocation6], %s260
          %s262 = smul.u32 2, %s29
          %s264 = ssub.s32 1152, 1152
          %265 = vsyncadd %s258, %s264
          %s266 = smul.addr %s30, 36
          %s267 = sadd.s32 %s262, %s266
          %s268 = smul.addr %s267, 64
          %s269 = scalar_lea.hbm %s1, %s268
          %s270 = sshll.u32 %s261, 4
          %s271 = int_to_ptr.vmem [resolvable:$true] %s270
          %276 = dma.hbm_to_vmem [thread:$0]  %s269, 1152, %s271, %s258, 256, 128, 8
        $region40: #{tpu_custom_call.1} parent=31 // pred_fallthru
          _
      $region32: #{tpu_custom_call.1} parent=5 // pred_fallthru
        _
      %p277 = scmp.le.s32.totalorder 1, %s22
      %p278 = scmp.lt.s32.totalorder %s22, 7
      %p279 = pnand %p277, %p278
      %p280 = pneg %p279
      // Predicated region
      $region41: #{tpu_custom_call.1} parent=5 // pred_check
        _
      $region42: #{tpu_custom_call.1} parent=5 // pred_check_branch
        %282 = sbr.rel (%p279) target = $region44
      $region43: #{tpu_custom_call.1} parent=5 // pred_region
        %s283 = ssub.s32 %s22, 1
        %s284 = sand.u32 %s49, 1
        %s285 = scalar_lea.sflag [#allocation4], %s284
        %s286 = sand.u32 %s49, 1
        %s287 = smul.addr %s286, 72
        %s288 = scalar_lea.vmem [#allocation3], %s287
        // Predicated region
        $region45: #{tpu_custom_call.1} parent=43 // pred_check
          %p289 = pneg %p62
        $region46: #{tpu_custom_call.1} parent=43 // pred_check_branch
          %291 = sbr.rel (%p289) target = $region48
        $region47: #{tpu_custom_call.1} parent=43 // pred_region
          %292 = dma.done %s285, 1152
        $region48: #{tpu_custom_call.1} parent=43 // pred_fallthru
          _
        %s293 = sand.u32 %s77, 1
        %s294 = scalar_lea.sflag [#allocation7], %s293
        %s295 = sand.u32 %s77, 1
        %s296 = smul.addr %s295, 72
        %s297 = scalar_lea.vmem [#allocation6], %s296
        // Predicated region
        $region49: #{tpu_custom_call.1} parent=43 // pred_check
          %p298 = pneg %p90
        $region50: #{tpu_custom_call.1} parent=43 // pred_check_branch
          %300 = sbr.rel (%p298) target = $region52
        $region51: #{tpu_custom_call.1} parent=43 // pred_region
          %301 = dma.done %s294, 1152
        $region52: #{tpu_custom_call.1} parent=43 // pred_fallthru
          _
        %s302 = sand.u32 %s49, 1
        %s303 = scalar_lea.sflag [#allocation4], %s302
        %s304 = sand.u32 %s49, 1
        %s305 = smul.addr %s304, 72
        %s306 = scalar_lea.vmem [#allocation3], %s305
        %p307 = pneg %p62
        %p308 = pneg %p59
        %s309 = sand.u32 %s77, 1
        %s310 = scalar_lea.sflag [#allocation7], %s309
        %s311 = sand.u32 %s77, 1
        %s312 = smul.addr %s311, 72
        %s313 = scalar_lea.vmem [#allocation6], %s312
        %p314 = pneg %p90
        %p315 = pneg %p87
        %p316 = pneg %p111
        %p317 = pneg %p108
        %p318 = pneg %p132
        %p319 = pneg %p129
        %p320 = pneg %p153
        %p321 = pneg %p150
        %p322 = pneg %p174
        %p323 = pneg %p171
        %p324 = pneg %p200
        %p325 = pneg %p197
        %s326 = sand.u32 %s187, 1
        %s327 = scalar_lea.sflag [#allocation5], %s326
        %s328 = sand.u32 %s187, 1
        %s329 = smul.addr %s328, 2
        %s330 = scalar_lea.vmem [#allocation8], %s329
        %s331 = smul.u32 2, %s31
        %s332 = smul.u32 2, %s31
        %s333 = smul.u32 2, %s31
        %p335 = scmp.eq.s32.totalorder %s32, 0
        // Predicated region
        $region53: #{tpu_custom_call.1} parent=43 // pred_check
          %p336 = pneg %p335
        $region54: #{tpu_custom_call.1} parent=43 // pred_check_branch
          %338 = sbr.rel (%p336) target = $region56
        $region55: #{tpu_custom_call.1} parent=43 // pred_region
          %v339 = vlaneseq
          %vm340 = vcmp.ge.s32.totalorder %v339, 0
          %vm341 = vcmp.lt.s32.totalorder %v339, 256
          %vm342 = vmand %vm340, %vm341
          %343 = vst.msk [vmem:[%s330] sm:$0x3] %vm342, 0.0
        $region56: #{tpu_custom_call.1} parent=43 // pred_fallthru
          _
        %v344 = vld [vmem:[%s2] sm:$0xf]
        %v345 = vld [vmem:[%s2 + $0x4] sm:$0xf]
        %v346 = vld [vmem:[%s2 + $0x8] sm:$0xf]
        %v347 = vld [vmem:[%s2 + $0xc] sm:$0xf]
        %v348 = vld [vmem:[%s3] sm:$0xff]
        %v349 = vld [vmem:[%s3 + $0x8] sm:$0xff]
        %v350 = vld [vmem:[%s3 + $0x10] sm:$0xff]
        %v351 = vld [vmem:[%s3 + $0x18] sm:$0xff]
        %v352 = vld [vmem:[%s4] sm:$0xff]
        %v353 = vld [vmem:[%s4 + $0x8] sm:$0xff]
        %v354 = vld [vmem:[%s4 + $0x10] sm:$0xff]
        %v355 = vld [vmem:[%s4 + $0x18] sm:$0xff]
        %s356 = sld [smem:[#allocation2]]
        %v357 = vld [vmem:[%s288] sm:$0xff]
        %v358 = vld [vmem:[%s288 + $0x8] sm:$0xff]
        %v359 = vld [vmem:[%s288 + $0x10] sm:$0xff]
        %v360 = vld [vmem:[%s288 + $0x18] sm:$0xff]
        %v361 = vld [vmem:[%s288 + $0x20] sm:$0xff]
        %v362 = vld [vmem:[%s288 + $0x28] sm:$0xff]
        %v363 = vld [vmem:[%s288 + $0x30] sm:$0xff]
        %v364 = vld [vmem:[%s288 + $0x38] sm:$0xff]
        %v365 = vld [vmem:[%s288 + $0x40] sm:$0xff]
        %367 = vset.pattern.permute.xlu0 0
        %368 = vperm.xlu0 %367, %v348
        %v369 = vpop.permute.xlu0 %368
        %372 = vset.pattern.permute.xlu0 0
        %373 = vperm.xlu0 %372, %v349
        %v374 = vpop.permute.xlu0 %373
        %377 = vset.pattern.permute.xlu0 0
        %378 = vperm.xlu0 %377, %v350
        %v379 = vpop.permute.xlu0 %378
        %382 = vset.pattern.permute.xlu0 0
        %383 = vperm.xlu0 %382, %v351
        %v384 = vpop.permute.xlu0 %383
        %v390 = vunpack.c.l.b16 %v344
        %v391 = vunpack.c.l.b16 %v345
        %v392 = vunpack.c.l.b16 %v346
        %v393 = vunpack.c.l.b16 %v347
        %v394 = vpack.c.b16 %v391, %v390
        %v395 = vpack.c.b16 %v393, %v392
        %v405 = vunpack.c.l.b16 %v357
        %v406 = vunpack.c.h.b16 %v357
        %v407 = vunpack.c.l.b16 %v358
        %v408 = vunpack.c.h.b16 %v358
        %v409 = vunpack.c.l.b16 %v359
        %v410 = vunpack.c.h.b16 %v359
        %v411 = vunpack.c.l.b16 %v360
        %v412 = vunpack.c.h.b16 %v360
        %v413 = vunpack.c.l.b16 %v361
        %v414 = vunpack.c.h.b16 %v361
        %v415 = vunpack.c.l.b16 %v362
        %v416 = vunpack.c.h.b16 %v362
        %v417 = vunpack.c.l.b16 %v363
        %v418 = vunpack.c.h.b16 %v363
        %v419 = vunpack.c.l.b16 %v364
        %v420 = vunpack.c.h.b16 %v364
        %v421 = vunpack.c.l.b16 %v365
        %v422 = vunpack.c.h.b16 %v365
        %v423 = vpack.c.b16 %v407, %v405
        %v424 = vpack.c.b16 %v408, %v406
        %v425 = vpack.c.b16 %v411, %v409
        %v426 = vpack.c.b16 %v412, %v410
        %v427 = vpack.c.b16 %v415, %v413
        %v428 = vpack.c.b16 %v416, %v414
        %v429 = vpack.c.b16 %v419, %v417
        %v430 = vpack.c.b16 %v420, %v418
        %v431 = vpack.c.b16 %v421, %v421
        %v432 = vpack.c.b16 %v422, %v422
        %vm441 = vcmask 588800
        %v443 = vsel %vm441, %v394, 0
        %v446 = vsel %vm441, %v395, 0
        %vm448 = vcmask 1043456
        %v450 = vsel %vm448, %v431, 0
        %v453 = vsel %vm448, %v432, 0
        %455 = vmatprep.subr.bf16.mxu0 %v424
        %456 = vmatpush1.bf16.msra.mxu0 %v423
        %457 = vmatprep.subr.bf16.mxu0 %v426
        %458 = vmatpush1.bf16.msra.mxu0 %v425
        %459 = vmatprep.subr.bf16.mxu0 %v428
        %460 = vmatpush1.bf16.msra.mxu0 %v427
        %461 = vmatprep.subr.bf16.mxu0 %v430
        %462 = vmatpush1.bf16.msra.mxu0 %v429
        %463 = vmatprep.subr.bf16.mxu0 %v453
        %464 = vmatpush1.bf16.msra.mxu0 %v450
        %465 = vmatprep.subr.bf16.mxu0 0
        %466 = vmatpush1.bf16.msra.mxu0 0
        %467 = vmatprep.subr.bf16.mxu0 0
        %468 = vmatpush1.bf16.msra.mxu0 0
        %469 = vmatprep.subr.bf16.mxu0 0
        %470 = vmatpush1.bf16.msra.mxu0 0
        %471 = vmatprep.subr.bf16.mxu0 0
        %472 = vmatpush1.bf16.msra.mxu0 0
        %473 = vmatprep.subr.bf16.mxu0 0
        %474 = vmatpush1.bf16.msra.mxu0 0
        %475 = vmatprep.subr.bf16.mxu0 0
        %476 = vmatpush1.bf16.msra.mxu0 0
        %477 = vmatprep.subr.bf16.mxu0 0
        %478 = vmatpush1.bf16.msra.mxu0 0
        %479 = vmatprep.subr.bf16.mxu0 0
        %480 = vmatpush1.bf16.msra.mxu0 0
        %481 = vmatprep.subr.bf16.mxu0 0
        %482 = vmatpush1.bf16.msra.mxu0 0
        %483 = vmatprep.subr.bf16.mxu0 0
        %484 = vmatpush1.bf16.msra.mxu0 0
        %485 = vmatprep.subr.bf16.mxu0 0
        %486 = vmatpush1.bf16.msra.mxu0 0
        %487 = vmatprep.mubr.bf16.mxu0 0
        %488 = vmatmul.mubr.bf16.gmra.mrb[0].mxu0 %v443
        %v489 = vpop.f32.mrb[0].mxu0
        %v490 = vadd.f32 %v369, %v489
        %v491 = vpop.f32.mrb[0].mxu0
        %v492 = vadd.f32 %v369, %v491
        %v493 = vpop.f32.mrb[0].mxu0
        %v494 = vadd.f32 %v374, %v493
        %v495 = vpop.f32.mrb[0].mxu0
        %v496 = vadd.f32 %v374, %v495
        %497 = vmatprep.mubr.bf16.mxu0 0
        %498 = vmatmul.mubr.bf16.gmra.mrb[0].mxu0 %v446
        %v499 = vpop.f32.mrb[0].mxu0
        %v500 = vadd.f32 %v379, %v499
        %v501 = vpop.f32.mrb[0].mxu0
        %v502 = vadd.f32 %v379, %v501
        %v503 = vpop.f32.mrb[0].mxu0
        %v504 = vadd.f32 %v384, %v503
        %v505 = vpop.f32.mrb[0].mxu0
        %v506 = vadd.f32 %v384, %v505
        %507 = vdwg.mxu0
        %v508 = vmax.f32 %v490, 0.0
        %v509 = vmax.f32 %v492, 0.0
        %v510 = vmax.f32 %v494, 0.0
        %v511 = vmax.f32 %v496, 0.0
        %v512 = vmax.f32 %v500, 0.0
        %v513 = vmax.f32 %v502, 0.0
        %v514 = vmax.f32 %v504, 0.0
        %v515 = vmax.f32 %v506, 0.0
        %517 = vset.pattern.permute.xlu0 0
        %518 = vperm.xlu0 %517, %v352
        %v519 = vpop.permute.xlu0 %518
        %522 = vset.pattern.permute.xlu0 0
        %523 = vperm.xlu0 %522, %v353
        %v524 = vpop.permute.xlu0 %523
        %527 = vset.pattern.permute.xlu0 0
        %528 = vperm.xlu0 %527, %v354
        %v529 = vpop.permute.xlu0 %528
        %532 = vset.pattern.permute.xlu0 0
        %533 = vperm.xlu0 %532, %v355
        %v534 = vpop.permute.xlu0 %533
        %v536 = vmul.f32 %v508, %v519
        %v537 = vmul.f32 %v509, %v519
        %v538 = vmul.f32 %v510, %v524
        %v539 = vmul.f32 %v511, %v524
        %v540 = vmul.f32 %v512, %v529
        %v541 = vmul.f32 %v513, %v529
        %v542 = vmul.f32 %v514, %v534
        %v543 = vmul.f32 %v515, %v534
        %v544 = vadd.f32 %v536, %v538
        %v545 = vadd.f32 %v544, %v540
        %v546 = vadd.f32 %v545, %v542
        %v547 = vrot.slane %v546, 4
        %v548 = vadd.f32 %v546, %v547
        %v549 = vrot.slane %v548, 2
        %v550 = vadd.f32 %v548, %v549
        %v551 = vrot.slane %v550, 1
        %v552 = vadd.f32 %v550, %v551
        %v553 = vadd.f32 %v537, %v539
        %v554 = vadd.f32 %v553, %v541
        %v555 = vadd.f32 %v554, %v543
        %v556 = vrot.slane %v555, 4
        %v557 = vadd.f32 %v555, %v556
        %v558 = vrot.slane %v557, 2
        %v559 = vadd.f32 %v557, %v558
        %v560 = vrot.slane %v559, 1
        %v561 = vadd.f32 %v559, %v560
        %v562 = vstv %s356
        %v563 = vadd.f32 %v552, %v562
        %v564 = vadd.f32 %v561, %v562
        %v565 = vld [vmem:[%s297] sm:$0xff]
        %v566 = vld [vmem:[%s297 + $0x8] sm:$0xff]
        %v567 = vld [vmem:[%s297 + $0x10] sm:$0xff]
        %v568 = vld [vmem:[%s297 + $0x18] sm:$0xff]
        %v569 = vld [vmem:[%s297 + $0x20] sm:$0xff]
        %v570 = vld [vmem:[%s297 + $0x28] sm:$0xff]
        %v571 = vld [vmem:[%s297 + $0x30] sm:$0xff]
        %v572 = vld [vmem:[%s297 + $0x38] sm:$0xff]
        %v573 = vld [vmem:[%s297 + $0x40] sm:$0xff]
        %v583 = vunpack.c.l.b16 %v565
        %v584 = vunpack.c.h.b16 %v565
        %v585 = vunpack.c.l.b16 %v566
        %v586 = vunpack.c.h.b16 %v566
        %v587 = vunpack.c.l.b16 %v567
        %v588 = vunpack.c.h.b16 %v567
        %v589 = vunpack.c.l.b16 %v568
        %v590 = vunpack.c.h.b16 %v568
        %v591 = vunpack.c.l.b16 %v569
        %v592 = vunpack.c.h.b16 %v569
        %v593 = vunpack.c.l.b16 %v570
        %v594 = vunpack.c.h.b16 %v570
        %v595 = vunpack.c.l.b16 %v571
        %v596 = vunpack.c.h.b16 %v571
        %v597 = vunpack.c.l.b16 %v572
        %v598 = vunpack.c.h.b16 %v572
        %v599 = vunpack.c.l.b16 %v573
        %v600 = vunpack.c.h.b16 %v573
        %v601 = vpack.c.b16 %v585, %v583
        %v602 = vpack.c.b16 %v586, %v584
        %v603 = vpack.c.b16 %v589, %v587
        %v604 = vpack.c.b16 %v590, %v588
        %v605 = vpack.c.b16 %v593, %v591
        %v606 = vpack.c.b16 %v594, %v592
        %v607 = vpack.c.b16 %v597, %v595
        %v608 = vpack.c.b16 %v598, %v596
        %v609 = vpack.c.b16 %v599, %v599
        %v610 = vpack.c.b16 %v600, %v600
        %v620 = vsel %vm448, %v609, 0
        %v623 = vsel %vm448, %v610, 0
        %625 = vmatprep.subr.bf16.mxu0 %v602
        %626 = vmatpush1.bf16.msra.mxu0 %v601
        %627 = vmatprep.subr.bf16.mxu0 %v604
        %628 = vmatpush1.bf16.msra.mxu0 %v603
        %629 = vmatprep.subr.bf16.mxu0 %v606
        %630 = vmatpush1.bf16.msra.mxu0 %v605
        %631 = vmatprep.subr.bf16.mxu0 %v608
        %632 = vmatpush1.bf16.msra.mxu0 %v607
        %633 = vmatprep.subr.bf16.mxu0 %v623
        %634 = vmatpush1.bf16.msra.mxu0 %v620
        %635 = vmatprep.subr.bf16.mxu0 0
        %636 = vmatpush1.bf16.msra.mxu0 0
        %637 = vmatprep.subr.bf16.mxu0 0
        %638 = vmatpush1.bf16.msra.mxu0 0
        %639 = vmatprep.subr.bf16.mxu0 0
        %640 = vmatpush1.bf16.msra.mxu0 0
        %641 = vmatprep.subr.bf16.mxu0 0
        %642 = vmatpush1.bf16.msra.mxu0 0
        %643 = vmatprep.subr.bf16.mxu0 0
        %644 = vmatpush1.bf16.msra.mxu0 0
        %645 = vmatprep.subr.bf16.mxu0 0
        %646 = vmatpush1.bf16.msra.mxu0 0
        %647 = vmatprep.subr.bf16.mxu0 0
        %648 = vmatpush1.bf16.msra.mxu0 0
        %649 = vmatprep.subr.bf16.mxu0 0
        %650 = vmatpush1.bf16.msra.mxu0 0
        %651 = vmatprep.subr.bf16.mxu0 0
        %652 = vmatpush1.bf16.msra.mxu0 0
        %653 = vmatprep.subr.bf16.mxu0 0
        %654 = vmatpush1.bf16.msra.mxu0 0
        %655 = vmatprep.subr.bf16.mxu0 0
        %656 = vmatpush1.bf16.msra.mxu0 0
        %657 = vmatprep.mubr.bf16.mxu0 0
        %658 = vmatmul.mubr.bf16.gmra.mrb[0].mxu0 %v443
        %v659 = vpop.f32.mrb[0].mxu0
        %v660 = vadd.f32 %v369, %v659
        %v661 = vpop.f32.mrb[0].mxu0
        %v662 = vadd.f32 %v369, %v661
        %v663 = vpop.f32.mrb[0].mxu0
        %v664 = vadd.f32 %v374, %v663
        %v665 = vpop.f32.mrb[0].mxu0
        %v666 = vadd.f32 %v374, %v665
        %667 = vmatprep.mubr.bf16.mxu0 0
        %668 = vmatmul.mubr.bf16.gmra.mrb[0].mxu0 %v446
        %v669 = vpop.f32.mrb[0].mxu0
        %v670 = vadd.f32 %v379, %v669
        %v671 = vpop.f32.mrb[0].mxu0
        %v672 = vadd.f32 %v379, %v671
        %v673 = vpop.f32.mrb[0].mxu0
        %v674 = vadd.f32 %v384, %v673
        %v675 = vpop.f32.mrb[0].mxu0
        %v676 = vadd.f32 %v384, %v675
        %677 = vdwg.mxu0
        %v678 = vmax.f32 %v660, 0.0
        %v679 = vmax.f32 %v662, 0.0
        %v680 = vmax.f32 %v664, 0.0
        %v681 = vmax.f32 %v666, 0.0
        %v682 = vmax.f32 %v670, 0.0
        %v683 = vmax.f32 %v672, 0.0
        %v684 = vmax.f32 %v674, 0.0
        %v685 = vmax.f32 %v676, 0.0
        %v686 = vmul.f32 %v678, %v519
        %v687 = vmul.f32 %v679, %v519
        %v688 = vmul.f32 %v680, %v524
        %v689 = vmul.f32 %v681, %v524
        %v690 = vmul.f32 %v682, %v529
        %v691 = vmul.f32 %v683, %v529
        %v692 = vmul.f32 %v684, %v534
        %v693 = vmul.f32 %v685, %v534
        %v694 = vadd.f32 %v686, %v688
        %v695 = vadd.f32 %v694, %v690
        %v696 = vadd.f32 %v695, %v692
        %v697 = vrot.slane %v696, 4
        %v698 = vadd.f32 %v696, %v697
        %v699 = vrot.slane %v698, 2
        %v700 = vadd.f32 %v698, %v699
        %v701 = vrot.slane %v700, 1
        %v702 = vadd.f32 %v700, %v701
        %v703 = vadd.f32 %v687, %v689
        %v704 = vadd.f32 %v703, %v691
        %v705 = vadd.f32 %v704, %v693
        %v706 = vrot.slane %v705, 4
        %v707 = vadd.f32 %v705, %v706
        %v708 = vrot.slane %v707, 2
        %v709 = vadd.f32 %v707, %v708
        %v710 = vrot.slane %v709, 1
        %v711 = vadd.f32 %v709, %v710
        %v712 = vadd.f32 %v702, %v562
        %v713 = vadd.f32 %v711, %v562
        %v714 = vld [vmem:[%s330] sm:$0x3]
        %v715 = vmax.f32 %v712, 0.0
        %v716 = vmax.f32 %v713, 0.0
        %v717 = vand.u32 2147483647, %v712
        %v718 = vand.u32 2147483647, %v713
        %v719 = vsub.f32 0.0, %v717
        %v720 = vsub.f32 0.0, %v718
        %v721 = vmul.f32 %v719, 1.442695
        %v722 = vpow.pop %v721
        %v723 = vmul.f32 %v720, 1.442695
        %v724 = vpow.pop %v723
        %v725 = vadd.f32 %v722, 1.0
        %v726 = vlog2.pop %v725
        %v727 = vmul.f32 %v726, 0.6931472
        %v728 = vmul.f32 -0.5, %v722
        %v729 = vadd.f32 %v728, 1.0
        %v730 = vmul.f32 %v729, %v722
        %v731 = vand.u32 2147483647, %v722
        %vm732 = vcmp.lt.f32.partialorder %v731, 0.0004427343
        %v733 = vsel %vm732, %v730, %v727
        %v734 = vadd.f32 %v724, 1.0
        %v735 = vlog2.pop %v734
        %v736 = vmul.f32 %v735, 0.6931472
        %v737 = vmul.f32 -0.5, %v724
        %v738 = vadd.f32 %v737, 1.0
        %v739 = vmul.f32 %v738, %v724
        %v740 = vand.u32 2147483647, %v724
        %vm741 = vcmp.lt.f32.partialorder %v740, 0.0004427343
        %v742 = vsel %vm741, %v739, %v736
        %v743 = vadd.f32 %v715, %v733
        %v744 = vadd.f32 %v716, %v742
        %v745 = vsub.f32 0.0, %v563
        %v746 = vsub.f32 0.0, %v564
        %v747 = vmax.f32 %v745, 0.0
        %v748 = vmax.f32 %v746, 0.0
        %v749 = vand.u32 2147483647, %v745
        %v750 = vand.u32 2147483647, %v746
        %v751 = vsub.f32 0.0, %v749
        %v752 = vsub.f32 0.0, %v750
        %v753 = vmul.f32 %v751, 1.442695
        %v754 = vpow.pop %v753
        %v755 = vmul.f32 %v752, 1.442695
        %v756 = vpow.pop %v755
        %v757 = vadd.f32 %v754, 1.0
        %v758 = vlog2.pop %v757
        %v759 = vmul.f32 %v758, 0.6931472
        %v760 = vmul.f32 -0.5, %v754
        %v761 = vadd.f32 %v760, 1.0
        %v762 = vmul.f32 %v761, %v754
        %v763 = vand.u32 2147483647, %v754
        %vm764 = vcmp.lt.f32.partialorder %v763, 0.0004427343
        %v765 = vsel %vm764, %v762, %v759
        %v766 = vadd.f32 %v756, 1.0
        %v767 = vlog2.pop %v766
        %v768 = vmul.f32 %v767, 0.6931472
        %v769 = vmul.f32 -0.5, %v756
        %v770 = vadd.f32 %v769, 1.0
        %v771 = vmul.f32 %v770, %v756
        %v772 = vand.u32 2147483647, %v756
        %vm773 = vcmp.lt.f32.partialorder %v772, 0.0004427343
        %v774 = vsel %vm773, %v771, %v768
        %v775 = vadd.f32 %v747, %v765
        %v776 = vadd.f32 %v748, %v774
        %v777 = vadd.f32 %v743, %v775
        %v778 = vadd.f32 %v744, %v776
        %v781 = vcombine.low %v777, %v778
        %v783 = vunpack.c.l.s4 1966171168
        %v784 = vunpack.c.0.s8 %v783
        %v785 = vlaneseq
        %v786 = vshrl.u32 %v785, 7
        %v787 = vsub.s32 %v784, %v786
        %v788 = vrot.slane %v781, %v787
        %v790 = vunpack.c.l.s4 1966171168
        %v791 = vunpack.c.0.s8 %v790
        %v792 = vlaneseq
        %v793 = vshrl.u32 %v792, 7
        %v794 = vsub.s32 %v791, %v793
        %v795 = vrot.slane %v788, %v794
        %v797 = vadd.f32 %v714, %v795
        %v798 = vlaneseq
        %vm799 = vcmp.ge.s32.totalorder %v798, 0
        %vm800 = vcmp.lt.s32.totalorder %v798, 256
        %vm801 = vmand %vm799, %vm800
        %802 = vst.msk [vmem:[%s330] sm:$0x3] %vm801, %v797
        %p803 = scmp.eq.s32.totalorder %s32, 2
        // Predicated region
        $region57: #{tpu_custom_call.1} parent=43 // pred_check
          %p804 = pneg %p803
        $region58: #{tpu_custom_call.1} parent=43 // pred_check_branch
          %806 = sbr.rel (%p804) target = $region60
        $region59: #{tpu_custom_call.1} parent=43 // pred_region
          %v807 = vld [vmem:[%s330] sm:$0x3]
          %v808 = vmul.f32 %v807, 0.33333334
          %809 = vst.msk [vmem:[%s330] sm:$0x3] %vm801, %v808
        $region60: #{tpu_custom_call.1} parent=43 // pred_fallthru
          _
        %s810 = sand.u32 %s187, 1
        %s811 = scalar_lea.sflag [#allocation5], %s810
        %s812 = sand.u32 %s187, 1
        %s813 = smul.addr %s812, 2
        %s814 = scalar_lea.vmem [#allocation8], %s813
        // Predicated region
        $region61: #{tpu_custom_call.1} parent=43 // pred_check
          %p815 = pneg %p197
        $region62: #{tpu_custom_call.1} parent=43 // pred_check_branch
          %817 = sbr.rel (%p815) target = $region64
        $region63: #{tpu_custom_call.1} parent=43 // pred_region
          %s818 = smul.u32 2, %s31
          %s820 = ssub.s32 32, 32
          %821 = vsyncadd %s811, %s820
          %s822 = smul.addr %s818, 16
          %s823 = scalar_lea.hbm %s6, %s822
          %s825 = sshll.u32 %s814, 4
          %s826 = int_to_ptr.vmem [resolvable:$true] %s825
          %828 = dma.vmem_to_hbm [thread:$0]  %s826, 32, %s823, %s811
        $region64: #{tpu_custom_call.1} parent=43 // pred_fallthru
          _
      $region44: #{tpu_custom_call.1} parent=5 // pred_fallthru
        _
      %p829 = scmp.le.s32.totalorder 2, %s22
      // Predicated region
      $region65: #{tpu_custom_call.1} parent=5 // pred_check
        %p830 = pneg %p829
      $region66: #{tpu_custom_call.1} parent=5 // pred_check_branch
        %832 = sbr.rel (%p830) target = $region68
      $region67: #{tpu_custom_call.1} parent=5 // pred_region
        %s833 = ssub.s32 %s22, 2
        // Predicated region
        $region69: #{tpu_custom_call.1} parent=67 // pred_check
          %p834 = pneg %p203
        $region70: #{tpu_custom_call.1} parent=67 // pred_check_branch
          %836 = sbr.rel (%p834) target = $region72
        $region71: #{tpu_custom_call.1} parent=67 // pred_region
          %s837 = sand.u32 %s188, 1
          %s838 = scalar_lea.sflag [#allocation5], %s837
          %s839 = sand.u32 %s188, 1
          %s840 = smul.addr %s839, 2
          %s841 = scalar_lea.vmem [#allocation8], %s840
          %842 = dma.done %s838, 32
        $region72: #{tpu_custom_call.1} parent=67 // pred_fallthru
          _
      $region68: #{tpu_custom_call.1} parent=5 // pred_fallthru
        _
    $region6: #{tpu_custom_call.1} parent=1 // loop_footer
      %s26 = sadd.s32 1, %s22
    $region7: #{tpu_custom_call.1} parent=1 // loop_footer_branch
      %21 = sbr.rel target = $region3
    $region8: #{tpu_custom_call.1} parent=1 // loop_exit
      _
    %843 = vsyncpa [#allocation4], 1
    %s844 = scalar_lea.sflag [#allocation4], 1
    %845 = vsyncpa %s844, 1
    %846 = vsyncpa [#allocation7], 1
    %s847 = scalar_lea.sflag [#allocation7], 1
    %848 = vsyncpa %s847, 1
    %849 = vsyncpa [#allocation5], 1
    %s850 = scalar_lea.sflag [#allocation5], 1
    %851 = vsyncpa %s850, 1

</llo_original>
